<compile_context>
chip_gen: v6e
topology: v6e:2x2x1
jax: 0.10.0
libtpu: 0.0.40
codegen_flags: <defaults>
</compile_context>

<pallas_src>
import functools
import math

import jax
import jax.numpy as jnp
from jax.experimental import pallas as pl
from jax.experimental.pallas import tpu as pltpu


def _layer_norm_kernel(x_ref, w_ref, b_ref, o_ref, *, eps: float, hidden: int,
                       mxu_reduce: bool):
    w = w_ref[...].astype(jnp.float32)   # (1, H)
    b = b_ref[...].astype(jnp.float32)   # (1, H)
    inv_h = jnp.float32(1.0 / hidden)

    if mxu_reduce:
        # Offload the cross-lane row reductions to the (idle) MXU.  bf16
        # products accumulate in f32 natively, so the s1 path also skips the
        # f32 upcast.  Single-pass variance with the max(.,0) clamp; fine at
        # 16-bit input precision.
        xr = x_ref[...]
        ones_cols = jnp.ones((hidden, 128), dtype=xr.dtype)
        s1 = jnp.dot(xr, ones_cols, preferred_element_type=jnp.float32)[:, :1]
        s2 = jnp.dot(xr * xr, ones_cols,
                     preferred_element_type=jnp.float32)[:, :1]
        mean = s1 * inv_h
        var = jnp.maximum(s2 * inv_h - mean * mean, 0.0)
        inv = jax.lax.rsqrt(var + jnp.float32(eps))
        y = (xr.astype(jnp.float32) - mean) * (inv * w) + b
    else:
        # Two-pass statistics in f32 (robust to large-mean inputs, matches
        # F.layer_norm numerics closely).
        x = x_ref[...].astype(jnp.float32)
        mean = jnp.sum(x, axis=-1, keepdims=True) * inv_h
        xc = x - mean
        var = jnp.sum(xc * xc, axis=-1, keepdims=True) * inv_h
        inv = jax.lax.rsqrt(var + jnp.float32(eps))
        y = xc * (inv * w) + b

    o_ref[...] = y.astype(o_ref.dtype)


def _sublane_multiple(dtype) -> int:
    # Sub-32-bit dtypes pack along sublanes; keep row tiles aligned so the
    # tile loads/stores stay unmasked.
    itemsize = jnp.dtype(dtype).itemsize
    if itemsize >= 4:
        return 8
    if itemsize == 2:
        return 16
    return 32


def _tpu_generation_info():
    """Best-effort (vmem_capacity_bytes, is_v5e)."""
    vmem_cap = 64 << 20  # conservative default (v7x-sized) if query fails
    try:
        vmem_cap = int(pltpu.get_tpu_info().vmem_capacity_bytes)
    except Exception:
        pass
    is_v5e = False
    try:
        kind = jax.devices()[0].device_kind.lower()
        is_v5e = ("v5 lite" in kind) or ("v5e" in kind) or ("v5litepod" in kind)
    except Exception:
        pass
    return vmem_cap, is_v5e


def layer_norm_pallas(
    x,
    weight=None,
    bias=None,
    *,
    eps: float = 1e-5,
    row_tile: int | None = None,
    target_tile_bytes: int | None = None,
):
    """LayerNorm over the last axis of x (any leading dims), F.layer_norm semantics."""
    orig_shape = x.shape
    hidden = orig_shape[-1]
    rows = int(math.prod(orig_shape[:-1])) if len(orig_shape) > 1 else 1

    itemsize = jnp.dtype(x.dtype).itemsize
    sub = _sublane_multiple(x.dtype)
    vmem_cap, is_v5e = _tpu_generation_info()
    small_vmem = vmem_cap <= (96 << 20)   # v7x: 64 MiB physical VMEM

    # MXU row-sum offload: a win on v7x (VPU-bound otherwise), small-positive
    # on v6e, skipped on v5e (no bf16 VALU, firmly mem-bound anyway).
    mxu_reduce = (itemsize == 2
                  and jnp.issubdtype(x.dtype, jnp.floating)
                  and not is_v5e)

    if target_tile_bytes is None:
        if small_vmem:
            target_tile_bytes = 4 << 20     # v7x: leave room for f32 temps
        elif is_v5e:
            target_tile_bytes = 12 << 20    # 128 MiB VMEM, plenty of headroom
        else:
            target_tile_bytes = 8 << 20     # v6e

    vmem_budget_cap = (48 << 20) if small_vmem else (100 << 20)

    def vmem_needed(rt):
        tile_in = rt * hidden * itemsize
        f32_work = 3 * rt * hidden * 4            # f32 intermediates of a tile
        extra = 0
        if mxu_reduce:
            extra = hidden * 128 * itemsize + 2 * rt * 128 * 4  # ones + dot outs
        # in + out, each double-buffered, plus working set and slack.
        return 4 * tile_in + f32_work + extra + (2 << 20)

    row_bytes = max(1, hidden * itemsize)
    rows_ceil = -(-rows // sub) * sub

    # --- choose a row tile ---------------------------------------------------
    if row_tile is None:
        rt = max(sub, (target_tile_bytes // row_bytes // sub) * sub)
        rt = min(rt, rows_ceil)
    else:
        rt = max(sub, (int(row_tile) // sub) * sub)
        rt = min(rt, max(sub, rows_ceil))

    # Keep >= 4 grid steps where possible so both v7x TensorCores get >= 2
    # pipelined steps each (also helps v5e/v6e pipelining on small inputs).
    while pl.cdiv(rows, rt) < 4 and rt > sub:
        rt = max(sub, ((rt // 2) // sub) * sub)
    # Never exceed the per-generation VMEM budget (incl. f32 temporaries).
    while vmem_needed(rt) > vmem_budget_cap and rt > sub:
        rt = max(sub, ((rt // 2) // sub) * sub)
    # If a single block covers everything, use the exact row count (full-dim
    # block shapes are always legal, even when rows < sublane multiple).
    if rt >= rows:
        rt = rows
    row_tile = rt

    grid = (pl.cdiv(rows, row_tile),)

    x2 = x.reshape(rows, hidden)
    if weight is None:
        w2 = jnp.ones((1, hidden), dtype=x.dtype)
    else:
        w2 = weight.reshape(1, hidden)
    if bias is None:
        b2 = jnp.zeros((1, hidden), dtype=w2.dtype)
    else:
        b2 = bias.reshape(1, hidden)

    vmem_limit = int(min(vmem_budget_cap, max(32 << 20, vmem_needed(row_tile))))

    cost = pl.CostEstimate(
        flops=8 * rows * hidden,
        transcendentals=rows,
        bytes_accessed=2 * rows * hidden * itemsize
        + 2 * hidden * jnp.dtype(w2.dtype).itemsize,
    )

    # TODO(synk): for hidden < 128 (non lane-dense), a segmented fold of rows
    # into the lane axis would avoid masked partial stores; real model dims
    # (d_model multiples of 128) do not hit this path.

    kernel = functools.partial(_layer_norm_kernel, eps=eps, hidden=hidden,
                               mxu_reduce=mxu_reduce)

    out = pl.pallas_call(
        kernel,
        out_shape=jax.ShapeDtypeStruct((rows, hidden), x.dtype),
        grid_spec=pltpu.PrefetchScalarGridSpec(
            num_scalar_prefetch=0,
            grid=grid,
            in_specs=[
                pl.BlockSpec((row_tile, hidden), lambda i: (i, 0)),
                # Constant-index blocks: weight/bias stay resident, no re-DMA.
                pl.BlockSpec((1, hidden), lambda i: (0, 0)),
                pl.BlockSpec((1, hidden), lambda i: (0, 0)),
            ],
            out_specs=pl.BlockSpec((row_tile, hidden), lambda i: (i, 0)),
        ),
        compiler_params=pltpu.CompilerParams(
            dimension_semantics=("parallel",),
            vmem_limit_bytes=vmem_limit,
        ),
        cost_estimate=cost,
    )(x2, w2, b2)

    return out.reshape(orig_shape)


def layer_norm_ref(x, weight, bias, eps=1e-5):
    xf = x.astype(jnp.float32)
    mean = jnp.mean(xf, axis=-1, keepdims=True)
    var = jnp.mean((xf - mean) ** 2, axis=-1, keepdims=True)
    y = (xf - mean) * jax.lax.rsqrt(var + eps)
    if weight is not None:
        y = y * weight.astype(jnp.float32)
    if bias is not None:
        y = y + bias.astype(jnp.float32)
    return y.astype(x.dtype)


if __name__ == "__main__":
    eps = 1e-5
    key = jax.random.PRNGKey(0)

    # --- test 1: small f32 transformer-like shape (batch, seq, d_model) -----
    B, S, H = 2, 8, 32
    kx, kw, kb, kx2 = jax.random.split(key, 4)
    x = jax.random.normal(kx, (B, S, H), dtype=jnp.float32)
    # Module __init__ sets weight=ones, bias=zeros; perturb deterministically
    # so the affine path is actually exercised.
    weight = jnp.ones((H,), jnp.float32) + 0.1 * jax.random.normal(kw, (H,), jnp.float32)
    bias = jnp.zeros((H,), jnp.float32) + 0.1 * jax.random.normal(kb, (H,), jnp.float32)

    out = layer_norm_pallas(x, weight, bias, eps=eps)
    out = jax.block_until_ready(out)
    ref = layer_norm_ref(x, weight, bias, eps=eps)
    assert out.shape == x.shape and out.dtype == x.dtype
    assert jnp.allclose(out, ref, atol=1e-5, rtol=1e-5), "f32 mismatch vs reference"

    # --- test 2: bf16 with a ragged row count (exercises the unpadded ragged
    # final block and the MXU-reduction path) --------------------------------
    B2, S2, H2 = 3, 5, 128
    xb = jax.random.normal(kx2, (B2, S2, H2), dtype=jnp.float32).astype(jnp.bfloat16)
    wb = (jnp.ones((H2,), jnp.float32) + 0.05).astype(jnp.bfloat16)
    bb = jnp.full((H2,), 0.02, jnp.bfloat16)

    outb = layer_norm_pallas(xb, wb, bb, eps=eps)
    outb = jax.block_until_ready(outb)
    refb = layer_norm_ref(xb, wb, bb, eps=eps)
    assert outb.shape == xb.shape and outb.dtype == xb.dtype
    assert jnp.allclose(
        outb.astype(jnp.float32), refb.astype(jnp.float32), atol=2e-2, rtol=2e-2
    ), "bf16 mismatch vs reference"

    print("KERNEL_OK")
</pallas_src>

<mosaic_0001>
module attributes {stable_mosaic.version = 11 : i64} {
  func.func @_layer_norm_kernel(%arg0: i32, %arg1: memref<8x32xf32, #tpu.memory_space<vmem>>, %arg2: memref<1x32xf32, #tpu.memory_space<vmem>>, %arg3: memref<1x32xf32, #tpu.memory_space<vmem>>, %arg4: memref<8x32xf32, #tpu.memory_space<vmem>>) attributes {dimension_semantics = [#tpu.dimension_semantics<parallel>], iteration_bounds = array<i64: 2>, scalar_prefetch = 0 : i64, scratch_operands = 0 : i64, tpu.core_type = #tpu.core_type<tc>, window_params = [{transform_indices = @transform_0, window_bounds = array<i64: 8, 32>}, {pipeline_mode = #tpu.pipeline_mode<synchronous>, transform_indices = @transform_1, window_bounds = array<i64: 1, 32>}, {pipeline_mode = #tpu.pipeline_mode<synchronous>, transform_indices = @transform_2, window_bounds = array<i64: 1, 32>}, {transform_indices = @transform_3, window_bounds = array<i64: 8, 32>}]} {
    %c0 = arith.constant 0 : index
    %c0_0 = arith.constant 0 : index
    %0 = vector.load %arg2[%c0, %c0_0] : memref<1x32xf32, #tpu.memory_space<vmem>>, vector<1x32xf32>
    %c0_1 = arith.constant 0 : index
    %c0_2 = arith.constant 0 : index
    %1 = vector.load %arg3[%c0_1, %c0_2] : memref<1x32xf32, #tpu.memory_space<vmem>>, vector<1x32xf32>
    %c0_3 = arith.constant 0 : index
    %c0_4 = arith.constant 0 : index
    %2 = vector.load %arg1[%c0_3, %c0_4] : memref<8x32xf32, #tpu.memory_space<vmem>>, vector<8x32xf32>
    %cst = arith.constant dense<0.000000e+00> : vector<8xf32>
    %3 = vector.multi_reduction <add>, %2, %cst [1] : vector<8x32xf32> to vector<8xf32>
    %4 = vector.shape_cast %3 : vector<8xf32> to vector<8x1xf32>
    %cst_5 = arith.constant 3.125000e-02 : f32
    %5 = vector.broadcast %cst_5 : f32 to vector<8x1xf32>
    %6 = arith.mulf %4, %5 : vector<8x1xf32>
    %7 = vector.broadcast %6 : vector<8x1xf32> to vector<8x32xf32>
    %8 = arith.subf %2, %7 : vector<8x32xf32>
    %9 = arith.mulf %8, %8 : vector<8x32xf32>
    %cst_6 = arith.constant dense<0.000000e+00> : vector<8xf32>
    %10 = vector.multi_reduction <add>, %9, %cst_6 [1] : vector<8x32xf32> to vector<8xf32>
    %11 = vector.shape_cast %10 : vector<8xf32> to vector<8x1xf32>
    %cst_7 = arith.constant 3.125000e-02 : f32
    %12 = vector.broadcast %cst_7 : f32 to vector<8x1xf32>
    %13 = arith.mulf %11, %12 : vector<8x1xf32>
    %cst_8 = arith.constant 9.99999974E-6 : f32
    %14 = vector.broadcast %cst_8 : f32 to vector<8x1xf32>
    %15 = arith.addf %13, %14 : vector<8x1xf32>
    %16 = math.rsqrt %15 : vector<8x1xf32>
    %17 = vector.broadcast %16 : vector<8x1xf32> to vector<8x32xf32>
    %18 = vector.broadcast %0 : vector<1x32xf32> to vector<8x32xf32>
    %19 = arith.mulf %17, %18 : vector<8x32xf32>
    %20 = arith.mulf %8, %19 : vector<8x32xf32>
    %21 = vector.broadcast %1 : vector<1x32xf32> to vector<8x32xf32>
    %22 = arith.addf %20, %21 : vector<8x32xf32>
    %c0_9 = arith.constant 0 : index
    %c0_10 = arith.constant 0 : index
    %23 = vector.load %arg4[%c0_9, %c0_10] : memref<8x32xf32, #tpu.memory_space<vmem>>, vector<8x32xf32>
    tpu.vector_store %arg4[%c0_9, %c0_10], %22 {strides = array<i32>} : memref<8x32xf32, #tpu.memory_space<vmem>>, vector<8x32xf32>,
    return
  }
  func.func @transform_0(%arg0: i32) -> (i32, i32) {
    %c0_i32 = arith.constant 0 : i32
    %c0_i32_0 = arith.constant 0 : i32
    return %arg0, %c0_i32 : i32, i32
  }
  func.func @transform_1(%arg0: i32) -> (i32, i32) {
    %c0_i32 = arith.constant 0 : i32
    %c0_i32_0 = arith.constant 0 : i32
    %c0_i32_1 = arith.constant 0 : i32
    return %c0_i32, %c0_i32_0 : i32, i32
  }
  func.func @transform_2(%arg0: i32) -> (i32, i32) {
    %c0_i32 = arith.constant 0 : i32
    %c0_i32_0 = arith.constant 0 : i32
    %c0_i32_1 = arith.constant 0 : i32
    return %c0_i32, %c0_i32_0 : i32, i32
  }
  func.func @transform_3(%arg0: i32) -> (i32, i32) {
    %c0_i32 = arith.constant 0 : i32
    %c0_i32_0 = arith.constant 0 : i32
    return %arg0, %c0_i32 : i32, i32
  }
}

</mosaic_0001>

<llo_original>
// kernel: tpu_custom_call.1
$region0: #{tpu_custom_call.1}
  #allocation0 [shape = 'u32[]', space=smem, size = 0x4, offset = 0x4, fixed_abs, tag = 'smem constant byte address 0x4 - core index']
  #allocation1 [shape = 'u32[144,128]{1,0:T(1,128)}', space=vmem, size = 0x12000, scoped, tag = 'internal scratch']
  %s0 = inlined_call_operand.hbm [shape: f32[16,32], index: 0, kind: input, shape index: {}]
  %s1 = inlined_call_operand.vmem [shape: f32[1,32], index: 1, kind: input, shape index: {}]
  %s2 = inlined_call_operand.vmem [shape: f32[1,32], index: 2, kind: input, shape index: {}]
  %s3 = inlined_call_operand.hbm [shape: f32[16,32], index: 3, kind: output, shape index: {}]
  %s4 = sld [smem:[#allocation0]]
  $region49: #{tpu_custom_call.1} parent=0
    _
  %s6 = ssub.s32 1, %s4
  %s7 = scalar_select 0, %s6, %s4
  $region1: #{tpu_custom_call.1} parent=0
    #allocation2 [shape = 'u8[8192]{0}', space=vmem, size = 0x2000, scoped, tag = 'input window, operand 0']
    #allocation3 [shape = 's32[2]{0}', space=sflag, size = 0x8, scoped, tag = 'scoped memory for tpu_custom_call.1']
    #allocation4 [shape = 's32[2]{0}', space=sflag, size = 0x8, scoped, tag = 'scoped memory for tpu_custom_call.1']
    #allocation5 [shape = 'u8[8192]{0}', space=vmem, size = 0x2000, scoped, tag = 'output window, operand 0']
    %8 = vsyncpa [#allocation3], 0
    %s9 = scalar_lea.sflag [#allocation3], 1
    %10 = vsyncpa %s9, 0
    %11 = vsyncpa [#allocation4], 0
    %s12 = scalar_lea.sflag [#allocation4], 1
    %13 = vsyncpa %s12, 0
    loop: start=0, step=1, limit=4
    $region2: #{tpu_custom_call.1} parent=1 // loop_pre_header
      _
    $region3: #{tpu_custom_call.1} parent=1 // loop_header
      %s15 = sphi 0, %s19
      %p16 = scmp.ge.s32.totalorder %s15, 4
      %s25 = sphi 0, %s27
      %s28 = sphi 0, %s25
      %s29 = sphi 0, %s28
      %s45 = sphi 0, %s29
      %s49 = sphi 0, %s49
      %s51 = sphi 0, %s49
      %s52 = sphi 0, %s51
      %s66 = sphi 0, %s52
      %s70 = sphi 0, %s70
      %s72 = sphi 0, %s70
      %s73 = sphi 0, %s72
      %s87 = sphi 0, %s73
      %s93 = sphi 0, %s95
      %s96 = sphi 0, %s93
      %s97 = sphi 0, %s96
      %s113 = sphi 0, %s97
    $region4: #{tpu_custom_call.1} parent=1 // loop_header_branch
      %18 = sbr.rel (%p16) target = $region8
    $region5: #{tpu_custom_call.1} parent=1 // loop_body
      %s20 = ssub.s32 %s15, 1
      %s21 = ssub.s32 %s15, 2
      %s22 = sadd.s32 %s15, 1
      %s23 = ssub.s32 %s15, %s22
      %p24 = scmp.eq.s32.totalorder %s23, 0
      %s26 = sadd.s32 %s25, 1
      %s27 = scalar_select %p24, %s25, %s26
      %p30 = pneg %p24
      %p31 = scmp.eq.s32.totalorder %s15, 1
      %p32 = por %p30, %p31
      %p33 = scmp.ne.s32.totalorder %s25, %s28
      %p34 = scmp.eq.s32.totalorder %s15, 0
      %p35 = por %p33, %p34
      %p36 = scmp.ne.s32.totalorder %s25, %s28
      %p37 = scmp.eq.s32.totalorder %s20, 1
      %p38 = por %p36, %p37
      %p39 = scmp.ne.s32.totalorder %s28, %s29
      %p40 = scmp.eq.s32.totalorder %s20, 0
      %p41 = por %p39, %p40
      %p42 = scmp.ne.s32.totalorder %s28, %s29
      %p43 = scmp.eq.s32.totalorder %s21, 1
      %p44 = por %p42, %p43
      %p46 = scmp.ne.s32.totalorder %s29, %s45
      %p47 = scmp.eq.s32.totalorder %s21, 0
      %p48 = por %p46, %p47
      %s50 = sadd.s32 %s49, 1
      %p53 = scmp.eq.s32.totalorder %s15, 1
      %p54 = scmp.ne.s32.totalorder %s49, %s51
      %p55 = scmp.eq.s32.totalorder %s15, 0
      %p56 = por %p54, %p55
      %p57 = scmp.ne.s32.totalorder %s49, %s51
      %p58 = scmp.eq.s32.totalorder %s20, 1
      %p59 = por %p57, %p58
      %p60 = scmp.ne.s32.totalorder %s51, %s52
      %p61 = scmp.eq.s32.totalorder %s20, 0
      %p62 = por %p60, %p61
      %p63 = scmp.ne.s32.totalorder %s51, %s52
      %p64 = scmp.eq.s32.totalorder %s21, 1
      %p65 = por %p63, %p64
      %p67 = scmp.ne.s32.totalorder %s52, %s66
      %p68 = scmp.eq.s32.totalorder %s21, 0
      %p69 = por %p67, %p68
      %s71 = sadd.s32 %s70, 1
      %p74 = scmp.eq.s32.totalorder %s15, 1
      %p75 = scmp.ne.s32.totalorder %s70, %s72
      %p76 = scmp.eq.s32.totalorder %s15, 0
      %p77 = por %p75, %p76
      %p78 = scmp.ne.s32.totalorder %s70, %s72
      %p79 = scmp.eq.s32.totalorder %s20, 1
      %p80 = por %p78, %p79
      %p81 = scmp.ne.s32.totalorder %s72, %s73
      %p82 = scmp.eq.s32.totalorder %s20, 0
      %p83 = por %p81, %p82
      %p84 = scmp.ne.s32.totalorder %s72, %s73
      %p85 = scmp.eq.s32.totalorder %s21, 1
      %p86 = por %p84, %p85
      %p88 = scmp.ne.s32.totalorder %s73, %s87
      %p89 = scmp.eq.s32.totalorder %s21, 0
      %p90 = por %p88, %p89
      %s91 = ssub.s32 %s15, %s22
      %p92 = scmp.eq.s32.totalorder %s91, 0
      %s94 = sadd.s32 %s93, 1
      %s95 = scalar_select %p92, %s93, %s94
      %p98 = pneg %p92
      %p99 = scmp.eq.s32.totalorder %s15, 1
      %p100 = por %p98, %p99
      %p101 = scmp.ne.s32.totalorder %s93, %s96
      %p102 = scmp.eq.s32.totalorder %s15, 0
      %p103 = por %p101, %p102
      %p104 = scmp.ne.s32.totalorder %s93, %s96
      %p105 = scmp.eq.s32.totalorder %s20, 1
      %p106 = por %p104, %p105
      %p107 = scmp.ne.s32.totalorder %s96, %s97
      %p108 = scmp.eq.s32.totalorder %s20, 0
      %p109 = por %p107, %p108
      %p110 = scmp.ne.s32.totalorder %s96, %s97
      %p111 = scmp.eq.s32.totalorder %s21, 1
      %p112 = por %p110, %p111
      %p114 = scmp.ne.s32.totalorder %s97, %s113
      %p115 = scmp.eq.s32.totalorder %s21, 0
      %p116 = por %p114, %p115
      %p117 = scmp.le.s32.totalorder 1, %s15
      %p118 = scmp.lt.s32.totalorder %s15, 3
      %p119 = pnand %p117, %p118
      %p120 = pneg %p119
      // Predicated region
      $region9: #{tpu_custom_call.1} parent=5 // pred_check
        _
      $region10: #{tpu_custom_call.1} parent=5 // pred_check_branch
        %122 = sbr.rel (%p119) target = $region12
      $region11: #{tpu_custom_call.1} parent=5 // pred_region
        %s123 = ssub.s32 %s15, 1
        // Predicated region
        $region13: #{tpu_custom_call.1} parent=11 // pred_check
          %p124 = pneg %p62
        $region14: #{tpu_custom_call.1} parent=11 // pred_check_branch
          %126 = sbr.rel (%p124) target = $region16
        $region15: #{tpu_custom_call.1} parent=11 // pred_region
          _
        $region16: #{tpu_custom_call.1} parent=11 // pred_fallthru
          _
        // Predicated region
        $region17: #{tpu_custom_call.1} parent=11 // pred_check
          %p127 = pneg %p83
        $region18: #{tpu_custom_call.1} parent=11 // pred_check_branch
          %129 = sbr.rel (%p127) target = $region20
        $region19: #{tpu_custom_call.1} parent=11 // pred_region
          _
        $region20: #{tpu_custom_call.1} parent=11 // pred_fallthru
          _
      $region12: #{tpu_custom_call.1} parent=5 // pred_fallthru
        _
      %p130 = scmp.lt.s32.totalorder %s15, 2
      // Predicated region
      $region21: #{tpu_custom_call.1} parent=5 // pred_check
        %p131 = pneg %p130
      $region22: #{tpu_custom_call.1} parent=5 // pred_check_branch
        %133 = sbr.rel (%p131) target = $region24
      $region23: #{tpu_custom_call.1} parent=5 // pred_region
        // Predicated region
        $region25: #{tpu_custom_call.1} parent=23 // pred_check
          %p134 = pneg %p35
        $region26: #{tpu_custom_call.1} parent=23 // pred_check_branch
          %136 = sbr.rel (%p134) target = $region28
        $region27: #{tpu_custom_call.1} parent=23 // pred_region
          %s137 = sand.u32 %s25, 1
          %s138 = scalar_lea.sflag [#allocation3], %s137
          %s139 = sand.u32 %s25, 1
          %s140 = smul.addr %s139, 8
          %s141 = scalar_lea.vmem [#allocation2], %s140
          %s143 = ssub.s32 128, 128
          %144 = vsyncadd %s138, %s143
          %s145 = smul.addr %s15, 128
          %s146 = scalar_lea.hbm %s0, %s145
          %s148 = sshll.u32 %s141, 4
          %s149 = int_to_ptr.vmem [resolvable:$true] %s148
          %151 = dma.hbm_to_vmem [thread:$0]  %s146, 128, %s149, %s138
        $region28: #{tpu_custom_call.1} parent=23 // pred_fallthru
          _
      $region24: #{tpu_custom_call.1} parent=5 // pred_fallthru
        _
      %p152 = scmp.le.s32.totalorder 1, %s15
      %p153 = scmp.lt.s32.totalorder %s15, 3
      %p154 = pnand %p152, %p153
      %p155 = pneg %p154
      // Predicated region
      $region29: #{tpu_custom_call.1} parent=5 // pred_check
        _
      $region30: #{tpu_custom_call.1} parent=5 // pred_check_branch
        %157 = sbr.rel (%p154) target = $region32
      $region31: #{tpu_custom_call.1} parent=5 // pred_region
        %s158 = ssub.s32 %s15, 1
        %s159 = sand.u32 %s28, 1
        %s160 = scalar_lea.sflag [#allocation3], %s159
        %s161 = sand.u32 %s28, 1
        %s162 = smul.addr %s161, 8
        %s163 = scalar_lea.vmem [#allocation2], %s162
        // Predicated region
        $region33: #{tpu_custom_call.1} parent=31 // pred_check
          %p164 = pneg %p41
        $region34: #{tpu_custom_call.1} parent=31 // pred_check_branch
          %166 = sbr.rel (%p164) target = $region36
        $region35: #{tpu_custom_call.1} parent=31 // pred_region
          %167 = dma.done %s160, 128
        $region36: #{tpu_custom_call.1} parent=31 // pred_fallthru
          _
        %s168 = sand.u32 %s28, 1
        %s169 = scalar_lea.sflag [#allocation3], %s168
        %s170 = sand.u32 %s28, 1
        %s171 = smul.addr %s170, 8
        %s172 = scalar_lea.vmem [#allocation2], %s171
        %p173 = pneg %p41
        %p174 = pneg %p38
        %p175 = pneg %p62
        %p176 = pneg %p59
        %p177 = pneg %p83
        %p178 = pneg %p80
        %p179 = pneg %p109
        %p180 = pneg %p106
        %s181 = sand.u32 %s96, 1
        %s182 = scalar_lea.sflag [#allocation4], %s181
        %s183 = sand.u32 %s96, 1
        %s184 = smul.addr %s183, 8
        %s185 = scalar_lea.vmem [#allocation5], %s184
        %v186 = vld [vmem:[%s1] sm:$0x1]
        %v187 = vld [vmem:[%s2] sm:$0x1]
        %v188 = vld [vmem:[%s163] sm:$0xff]
        %vm189 = vcmask 261120
        %v190 = vsel %vm189, %v188, 0.0
        %191 = vadd.xlane.f32.xlu0 %v190
        %v192 = vpop.xlane.xlu0 %191
        %v193 = vmul.f32 %v192, 0.03125
        %v194 = vsub.f32 %v188, %v193
        %v195 = vmul.f32 %v194, %v194
        %v196 = vsel %vm189, %v195, 0.0
        %197 = vadd.xlane.f32.xlu0 %v196
        %v198 = vpop.xlane.xlu0 %197
        %v199 = vmul.f32 %v198, 0.03125
        %v200 = vadd.f32 %v199, 1e-05
        %v201 = vrsqrt.pop %v200
        %v203 = vlaneseq
        %v204 = vshrl.u32 %v203, 7
        %v205 = vsub.s32 0, %v204
        %v206 = vrot.slane %v186, %v205
        %v208 = vmul.f32 %v201, %v206
        %v209 = vmul.f32 %v194, %v208
        %v211 = vlaneseq
        %v212 = vshrl.u32 %v211, 7
        %v213 = vsub.s32 0, %v212
        %v214 = vrot.slane %v187, %v213
        %v216 = vadd.f32 %v209, %v214
        %217 = vst.msk [vmem:[%s185] sm:$0xff] %vm189, %v216
        %s218 = sand.u32 %s96, 1
        %s219 = scalar_lea.sflag [#allocation4], %s218
        %s220 = sand.u32 %s96, 1
        %s221 = smul.addr %s220, 8
        %s222 = scalar_lea.vmem [#allocation5], %s221
        // Predicated region
        $region37: #{tpu_custom_call.1} parent=31 // pred_check
          %p223 = pneg %p106
        $region38: #{tpu_custom_call.1} parent=31 // pred_check_branch
          %225 = sbr.rel (%p223) target = $region40
        $region39: #{tpu_custom_call.1} parent=31 // pred_region
          %s227 = ssub.s32 128, 128
          %228 = vsyncadd %s219, %s227
          %s229 = smul.addr %s20, 128
          %s230 = scalar_lea.hbm %s3, %s229
          %s232 = sshll.u32 %s222, 4
          %s233 = int_to_ptr.vmem [resolvable:$true] %s232
          %235 = dma.vmem_to_hbm [thread:$0]  %s233, 128, %s230, %s219
        $region40: #{tpu_custom_call.1} parent=31 // pred_fallthru
          _
      $region32: #{tpu_custom_call.1} parent=5 // pred_fallthru
        _
      %p236 = scmp.le.s32.totalorder 2, %s15
      // Predicated region
      $region41: #{tpu_custom_call.1} parent=5 // pred_check
        %p237 = pneg %p236
      $region42: #{tpu_custom_call.1} parent=5 // pred_check_branch
        %239 = sbr.rel (%p237) target = $region44
      $region43: #{tpu_custom_call.1} parent=5 // pred_region
        %s240 = ssub.s32 %s15, 2
        // Predicated region
        $region45: #{tpu_custom_call.1} parent=43 // pred_check
          %p241 = pneg %p112
        $region46: #{tpu_custom_call.1} parent=43 // pred_check_branch
          %243 = sbr.rel (%p241) target = $region48
        $region47: #{tpu_custom_call.1} parent=43 // pred_region
          %s244 = sand.u32 %s97, 1
          %s245 = scalar_lea.sflag [#allocation4], %s244
          %s246 = sand.u32 %s97, 1
          %s247 = smul.addr %s246, 8
          %s248 = scalar_lea.vmem [#allocation5], %s247
          %249 = dma.done %s245, 128
        $region48: #{tpu_custom_call.1} parent=43 // pred_fallthru
          _
      $region44: #{tpu_custom_call.1} parent=5 // pred_fallthru
        _
    $region6: #{tpu_custom_call.1} parent=1 // loop_footer
      %s19 = sadd.s32 1, %s15
    $region7: #{tpu_custom_call.1} parent=1 // loop_footer_branch
      %14 = sbr.rel target = $region3
    $region8: #{tpu_custom_call.1} parent=1 // loop_exit
      _
    %250 = vsyncpa [#allocation3], 1
    %s251 = scalar_lea.sflag [#allocation3], 1
    %252 = vsyncpa %s251, 1
    %253 = vsyncpa [#allocation4], 1
    %s254 = scalar_lea.sflag [#allocation4], 1
    %255 = vsyncpa %s254, 1

</llo_original>
